<compile_context>
chip_gen: v7x
topology: tpu7x:2x2x1
jax: 0.10.0
libtpu: 0.0.40
codegen_flags: <defaults>
</compile_context>

<pallas_src>
import math

import jax
import jax.numpy as jnp
from jax import lax
from jax.experimental import pallas as pl
from jax.experimental.pallas import tpu as pltpu

LANES = 128
_HOIST_VREG_BUDGET = 40  # max vregs of hoisted weight constants kept live in the loop


def _sublane_multiple(dtype):
    """Rows per vreg sublane tile for a dtype (f32: 8, bf16: 16, int8/fp8: 32)."""
    return 8 * max(1, 4 // jnp.dtype(dtype).itemsize)


def _tree_sum(terms):
    """Pairwise (tree) sum -> shorter dependency chains than a serial acc chain."""
    terms = list(terms)
    while len(terms) > 1:
        nxt = [terms[i] + terms[i + 1] for i in range(0, len(terms) - 1, 2)]
        if len(terms) % 2:
            nxt.append(terms[-1])
        terms = nxt
    return terms[0]


def make_nnan_kernel(dims, tile_rows, chunk_rows, compute_dtype, hoist_consts):
    """Kernel for static hidden widths `dims`, block (tile_rows, LANES)."""
    n_layers = len(dims)
    assert tile_rows % chunk_rows == 0, (tile_rows, chunk_rows)
    n_chunks = tile_rows // chunk_rows

    def kernel(x_ref, *refs):
        # refs = (w0, b0, W1, b1, ..., w_last, b_last, out_ref)
        out_ref = refs[-1]
        wb = refs[:-1]

        # ---- Read every SMEM scalar exactly once per grid step -------------
        # If hoisting, also materialize each weight as a chunk-shaped vreg
        # constant above the loop so the hot loop contains no broadcasts.
        if hoist_consts:
            def mk(v):
                return jnp.full((chunk_rows, LANES), v, compute_dtype)
        else:
            def mk(v):
                return jnp.asarray(v, compute_dtype)   # scalar splat per use

        w0 = [mk(wb[0][j]) for j in range(dims[0])]
        b0 = [mk(wb[1][j]) for j in range(dims[0])]
        mid = []
        for li in range(1, n_layers):
            W, b = wb[2 * li], wb[2 * li + 1]
            mid.append((
                [[mk(W[k, j]) for j in range(dims[li - 1])] for k in range(dims[li])],
                [mk(b[k]) for k in range(dims[li])],
            ))
        w_last = [mk(wb[2 * n_layers][j]) for j in range(dims[-1])]
        b_last = mk(wb[2 * n_layers + 1][0])

        # ---- Per-chunk unrolled MLP (pure VPU mul/add/max; no MXU) ----------
        def mlp(x):
            x = x.astype(compute_dtype)
            h = [jnp.maximum(w0[j] * x + b0[j], 0) for j in range(dims[0])]
            for li in range(1, n_layers):
                Wl, bv = mid[li - 1]
                h = [
                    jnp.maximum(
                        _tree_sum([Wl[k][j] * h[j] for j in range(dims[li - 1])]
                                  + [bv[k]]),
                        0)
                    for k in range(dims[li])
                ]
            return _tree_sum([w_last[j] * h[j] for j in range(dims[-1])] + [b_last])

        # ---- Walk the block in vreg-sized sub-chunks ------------------------
        # unroll=1: plenty of ILP inside one chunk; unrolling only adds vreg
        # pressure / spill stores (worst on v5e's single vst slot).
        def body(c, carry):
            r = pl.multiple_of(c * chunk_rows, chunk_rows)
            out_ref[pl.ds(r, chunk_rows), :] = mlp(
                x_ref[pl.ds(r, chunk_rows), :]).astype(out_ref.dtype)
            return carry

        lax.fori_loop(0, n_chunks, body, 0, unroll=1)

    return kernel


def nnan_apply(x, params, dims, *, tile_rows=4096, compute_dtype=None,
               ensure_two_grid_steps=True):
    """Apply the NNaN unit elementwise to `x` (any shape, any float dtype)."""
    orig_shape = x.shape
    orig_dtype = x.dtype
    n = x.size
    if n == 0:
        return x

    # f32 math by default (v5e has no bf16 VALU; also matches the reference).
    # On v6e/v7x, compute_dtype=jnp.bfloat16 is a ~2x VALU-throughput lever.
    if compute_dtype is None:
        compute_dtype = jnp.float32
    compute_dtype = jnp.dtype(compute_dtype)

    io_sub = _sublane_multiple(orig_dtype)      # 8 (f32) / 16 (bf16) / 32 (int8)
    cmp_sub = _sublane_multiple(compute_dtype)

    rows = pl.cdiv(n, LANES)
    pad = rows * LANES - n
    flat = x.reshape(-1)
    if pad:
        # Rare ragged path (numel % 128 != 0): pad + final slice each cost one
        # extra HBM pass; the (rows, 128) lane-dense view needs a rows*128 buffer.
        flat = jnp.pad(flat, (0, pad))
    x2d = flat.reshape(rows, LANES)

    # ---- Block sizing ------------------------------------------------------
    tile_rows = max(io_sub, (int(tile_rows) // io_sub) * io_sub)
    if rows <= io_sub:
        tile_rows_eff = rows                     # full-dim block (legal as-is)
    else:
        tile_rows_eff = min(tile_rows, (rows // io_sub) * io_sub)
        if ensure_two_grid_steps:
            # v7x has 2 TensorCores; a single-step grid pins all work on one.
            half = -(-rows // 2)
            half = -(-half // io_sub) * io_sub
            tile_rows_eff = min(tile_rows_eff, half)
    # tile_rows_eff is now == rows (tiny) or a multiple of io_sub -> legal
    # BlockSpec.  A partial last block reads undefined padding rows; the MLP
    # runs on them but the writes are dropped by Pallas (intentional garbage).
    grid = (pl.cdiv(rows, tile_rows_eff),)

    # ---- Chunk sizing / broadcast hoisting ----------------------------------
    pad_dims = [1] + list(dims) + [1]
    n_consts = sum(pad_dims[i] * pad_dims[i + 1] + pad_dims[i + 1]
                   for i in range(len(pad_dims) - 1))
    chunk_rows_eff = min(io_sub, tile_rows_eff)            # one vreg per array
    vregs_per_const = -(-chunk_rows_eff // cmp_sub)
    hoist = n_consts * vregs_per_const <= _HOIST_VREG_BUDGET
    if not hoist:
        big = 4 * io_sub                                    # 32 rows for f32
        if tile_rows_eff % big == 0:
            chunk_rows_eff = big

    kernel = make_nnan_kernel(dims, tile_rows_eff, chunk_rows_eff,
                              compute_dtype, hoist)
    weight_specs = [pl.BlockSpec(memory_space=pltpu.MemorySpace.SMEM) for _ in params]

    out2d = pl.pallas_call(
        kernel,
        out_shape=jax.ShapeDtypeStruct((rows, LANES), orig_dtype),
        grid=grid,
        in_specs=[pl.BlockSpec((tile_rows_eff, LANES), lambda i: (i, 0))] + weight_specs,
        out_specs=pl.BlockSpec((tile_rows_eff, LANES), lambda i: (i, 0)),
        compiler_params=pltpu.CompilerParams(dimension_semantics=("parallel",)),
    )(x2d, *params)

    if pad:
        return out2d.reshape(-1)[:n].reshape(orig_shape)
    return out2d.reshape(orig_shape)


def init_nnan_params(key, dims):
    """Deterministic init mimicking nn.Linear's U(-1/sqrt(fan_in), 1/sqrt(fan_in)).

    Flat list: [w0, b0, W1, b1, ..., w_last, b_last]; first-layer weight stored
    as (dims[0],) (fan_in=1), last as (dims[-1],) (fan_out=1).
    """
    pad_dims = [1] + list(dims) + [1]
    params = []
    for li in range(len(pad_dims) - 1):
        fan_in, fan_out = pad_dims[li], pad_dims[li + 1]
        bound = 1.0 / math.sqrt(fan_in)
        key, kw, kb = jax.random.split(key, 3)
        W = jax.random.uniform(kw, (fan_out, fan_in), jnp.float32, -bound, bound)
        b = jax.random.uniform(kb, (fan_out,), jnp.float32, -bound, bound)
        if fan_in == 1:
            W = W.reshape(fan_out)
        elif fan_out == 1:
            W = W.reshape(fan_in)
        params.extend([W, b])
    return params


def nnan_ref(x, params, dims):
    """Pure-JAX reference matching the PyTorch forward exactly."""
    pad_dims = [1] + list(dims) + [1]
    h = x.reshape(-1, 1).astype(jnp.float32)
    for li in range(len(pad_dims) - 1):
        W = params[2 * li].reshape(pad_dims[li + 1], pad_dims[li])
        b = params[2 * li + 1]
        h = jnp.einsum("nk,jk->nj", h, W, precision=lax.Precision.HIGHEST) + b
        if li < len(dims):
            h = jnp.maximum(h, 0.0)
    return h.reshape(x.shape).astype(x.dtype)


if __name__ == "__main__":
    dims = [4, 4]                            # NNaNUnit(dims=[4, 4])
    key = jax.random.PRNGKey(0)
    key, kx1, kx2, kx3, kx4 = jax.random.split(key, 5)
    params = init_nnan_params(key, dims)

    # Main test: NCHW activation tensor (typical use of the module).
    x = jax.random.normal(kx1, (2, 4, 16, 16), jnp.float32)
    out = jax.block_until_ready(nnan_apply(x, params, dims))
    ref = nnan_ref(x, params, dims)
    assert out.shape == x.shape and out.dtype == x.dtype
    assert jnp.allclose(out, ref, atol=1e-4, rtol=1e-4), "mismatch (small)"

    # Medium test: grid > 1, multi-chunk inner loop, 2-TC split path.
    x2 = jax.random.normal(kx2, (8, 32, 32, 32), jnp.float32)
    out2 = jax.block_until_ready(nnan_apply(x2, params, dims))
    ref2 = nnan_ref(x2, params, dims)
    assert jnp.allclose(out2, ref2, atol=1e-4, rtol=1e-4), "mismatch (medium)"

    # Odd-size test: the (rare) pad path / tiny full-dim block.
    x3 = jax.random.normal(kx3, (5, 7, 13), jnp.float32)
    out3 = jax.block_until_ready(nnan_apply(x3, params, dims))
    ref3 = nnan_ref(x3, params, dims)
    assert jnp.allclose(out3, ref3, atol=1e-4, rtol=1e-4), "mismatch (odd)"

    # bf16-I/O test: exercises the 16-row sublane rounding + non-hoisted path
    # (f32 math, bf16 load/store).
    x4 = jax.random.normal(kx4, (4, 8, 64), jnp.float32).astype(jnp.bfloat16)
    out4 = jax.block_until_ready(nnan_apply(x4, params, dims))
    ref4 = nnan_ref(x4, params, dims)
    assert out4.dtype == jnp.bfloat16
    assert jnp.allclose(out4.astype(jnp.float32), ref4.astype(jnp.float32),
                        atol=1e-2, rtol=1e-2), "mismatch (bf16)"

    print("KERNEL_OK")
</pallas_src>

<mosaic_0001>
module attributes {stable_mosaic.version = 11 : i64} {
  func.func @kernel(%arg0: i32, %arg1: memref<8x128xf32, #tpu.memory_space<vmem>>, %arg2: memref<4xf32, #tpu.memory_space<smem>>, %arg3: memref<4xf32, #tpu.memory_space<smem>>, %arg4: memref<4x4xf32, #tpu.memory_space<smem>>, %arg5: memref<4xf32, #tpu.memory_space<smem>>, %arg6: memref<4xf32, #tpu.memory_space<smem>>, %arg7: memref<1xf32, #tpu.memory_space<smem>>, %arg8: memref<8x128xf32, #tpu.memory_space<vmem>>) attributes {dimension_semantics = [#tpu.dimension_semantics<parallel>], iteration_bounds = array<i64: 2>, scalar_prefetch = 0 : i64, scratch_operands = 0 : i64, tpu.core_type = #tpu.core_type<tc>, window_params = [{transform_indices = @transform_0, window_bounds = array<i64: 8, 128>}, {transform_indices = @transform_1, window_bounds = array<i64: 4>}, {transform_indices = @transform_2, window_bounds = array<i64: 4>}, {transform_indices = @transform_3, window_bounds = array<i64: 4, 4>}, {transform_indices = @transform_4, window_bounds = array<i64: 4>}, {transform_indices = @transform_5, window_bounds = array<i64: 4>}, {transform_indices = @transform_6, window_bounds = array<i64: 1>}, {transform_indices = @transform_7, window_bounds = array<i64: 8, 128>}]} {
    %c0 = arith.constant 0 : index
    %0 = memref.load %arg2[%c0] : memref<4xf32, #tpu.memory_space<smem>>
    %1 = vector.broadcast %0 : f32 to vector<8x128xf32>
    %c1 = arith.constant 1 : index
    %2 = memref.load %arg2[%c1] : memref<4xf32, #tpu.memory_space<smem>>
    %3 = vector.broadcast %2 : f32 to vector<8x128xf32>
    %c2 = arith.constant 2 : index
    %4 = memref.load %arg2[%c2] : memref<4xf32, #tpu.memory_space<smem>>
    %5 = vector.broadcast %4 : f32 to vector<8x128xf32>
    %c3 = arith.constant 3 : index
    %6 = memref.load %arg2[%c3] : memref<4xf32, #tpu.memory_space<smem>>
    %7 = vector.broadcast %6 : f32 to vector<8x128xf32>
    %c0_0 = arith.constant 0 : index
    %8 = memref.load %arg3[%c0_0] : memref<4xf32, #tpu.memory_space<smem>>
    %9 = vector.broadcast %8 : f32 to vector<8x128xf32>
    %c1_1 = arith.constant 1 : index
    %10 = memref.load %arg3[%c1_1] : memref<4xf32, #tpu.memory_space<smem>>
    %11 = vector.broadcast %10 : f32 to vector<8x128xf32>
    %c2_2 = arith.constant 2 : index
    %12 = memref.load %arg3[%c2_2] : memref<4xf32, #tpu.memory_space<smem>>
    %13 = vector.broadcast %12 : f32 to vector<8x128xf32>
    %c3_3 = arith.constant 3 : index
    %14 = memref.load %arg3[%c3_3] : memref<4xf32, #tpu.memory_space<smem>>
    %15 = vector.broadcast %14 : f32 to vector<8x128xf32>
    %c0_4 = arith.constant 0 : index
    %c0_5 = arith.constant 0 : index
    %16 = memref.load %arg4[%c0_4, %c0_5] : memref<4x4xf32, #tpu.memory_space<smem>>
    %17 = vector.broadcast %16 : f32 to vector<8x128xf32>
    %c0_6 = arith.constant 0 : index
    %c1_7 = arith.constant 1 : index
    %18 = memref.load %arg4[%c0_6, %c1_7] : memref<4x4xf32, #tpu.memory_space<smem>>
    %19 = vector.broadcast %18 : f32 to vector<8x128xf32>
    %c0_8 = arith.constant 0 : index
    %c2_9 = arith.constant 2 : index
    %20 = memref.load %arg4[%c0_8, %c2_9] : memref<4x4xf32, #tpu.memory_space<smem>>
    %21 = vector.broadcast %20 : f32 to vector<8x128xf32>
    %c0_10 = arith.constant 0 : index
    %c3_11 = arith.constant 3 : index
    %22 = memref.load %arg4[%c0_10, %c3_11] : memref<4x4xf32, #tpu.memory_space<smem>>
    %23 = vector.broadcast %22 : f32 to vector<8x128xf32>
    %c1_12 = arith.constant 1 : index
    %c0_13 = arith.constant 0 : index
    %24 = memref.load %arg4[%c1_12, %c0_13] : memref<4x4xf32, #tpu.memory_space<smem>>
    %25 = vector.broadcast %24 : f32 to vector<8x128xf32>
    %c1_14 = arith.constant 1 : index
    %c1_15 = arith.constant 1 : index
    %26 = memref.load %arg4[%c1_14, %c1_15] : memref<4x4xf32, #tpu.memory_space<smem>>
    %27 = vector.broadcast %26 : f32 to vector<8x128xf32>
    %c1_16 = arith.constant 1 : index
    %c2_17 = arith.constant 2 : index
    %28 = memref.load %arg4[%c1_16, %c2_17] : memref<4x4xf32, #tpu.memory_space<smem>>
    %29 = vector.broadcast %28 : f32 to vector<8x128xf32>
    %c1_18 = arith.constant 1 : index
    %c3_19 = arith.constant 3 : index
    %30 = memref.load %arg4[%c1_18, %c3_19] : memref<4x4xf32, #tpu.memory_space<smem>>
    %31 = vector.broadcast %30 : f32 to vector<8x128xf32>
    %c2_20 = arith.constant 2 : index
    %c0_21 = arith.constant 0 : index
    %32 = memref.load %arg4[%c2_20, %c0_21] : memref<4x4xf32, #tpu.memory_space<smem>>
    %33 = vector.broadcast %32 : f32 to vector<8x128xf32>
    %c2_22 = arith.constant 2 : index
    %c1_23 = arith.constant 1 : index
    %34 = memref.load %arg4[%c2_22, %c1_23] : memref<4x4xf32, #tpu.memory_space<smem>>
    %35 = vector.broadcast %34 : f32 to vector<8x128xf32>
    %c2_24 = arith.constant 2 : index
    %c2_25 = arith.constant 2 : index
    %36 = memref.load %arg4[%c2_24, %c2_25] : memref<4x4xf32, #tpu.memory_space<smem>>
    %37 = vector.broadcast %36 : f32 to vector<8x128xf32>
    %c2_26 = arith.constant 2 : index
    %c3_27 = arith.constant 3 : index
    %38 = memref.load %arg4[%c2_26, %c3_27] : memref<4x4xf32, #tpu.memory_space<smem>>
    %39 = vector.broadcast %38 : f32 to vector<8x128xf32>
    %c3_28 = arith.constant 3 : index
    %c0_29 = arith.constant 0 : index
    %40 = memref.load %arg4[%c3_28, %c0_29] : memref<4x4xf32, #tpu.memory_space<smem>>
    %41 = vector.broadcast %40 : f32 to vector<8x128xf32>
    %c3_30 = arith.constant 3 : index
    %c1_31 = arith.constant 1 : index
    %42 = memref.load %arg4[%c3_30, %c1_31] : memref<4x4xf32, #tpu.memory_space<smem>>
    %43 = vector.broadcast %42 : f32 to vector<8x128xf32>
    %c3_32 = arith.constant 3 : index
    %c2_33 = arith.constant 2 : index
    %44 = memref.load %arg4[%c3_32, %c2_33] : memref<4x4xf32, #tpu.memory_space<smem>>
    %45 = vector.broadcast %44 : f32 to vector<8x128xf32>
    %c3_34 = arith.constant 3 : index
    %c3_35 = arith.constant 3 : index
    %46 = memref.load %arg4[%c3_34, %c3_35] : memref<4x4xf32, #tpu.memory_space<smem>>
    %47 = vector.broadcast %46 : f32 to vector<8x128xf32>
    %c0_36 = arith.constant 0 : index
    %48 = memref.load %arg5[%c0_36] : memref<4xf32, #tpu.memory_space<smem>>
    %49 = vector.broadcast %48 : f32 to vector<8x128xf32>
    %c1_37 = arith.constant 1 : index
    %50 = memref.load %arg5[%c1_37] : memref<4xf32, #tpu.memory_space<smem>>
    %51 = vector.broadcast %50 : f32 to vector<8x128xf32>
    %c2_38 = arith.constant 2 : index
    %52 = memref.load %arg5[%c2_38] : memref<4xf32, #tpu.memory_space<smem>>
    %53 = vector.broadcast %52 : f32 to vector<8x128xf32>
    %c3_39 = arith.constant 3 : index
    %54 = memref.load %arg5[%c3_39] : memref<4xf32, #tpu.memory_space<smem>>
    %55 = vector.broadcast %54 : f32 to vector<8x128xf32>
    %c0_40 = arith.constant 0 : index
    %56 = memref.load %arg6[%c0_40] : memref<4xf32, #tpu.memory_space<smem>>
    %57 = vector.broadcast %56 : f32 to vector<8x128xf32>
    %c1_41 = arith.constant 1 : index
    %58 = memref.load %arg6[%c1_41] : memref<4xf32, #tpu.memory_space<smem>>
    %59 = vector.broadcast %58 : f32 to vector<8x128xf32>
    %c2_42 = arith.constant 2 : index
    %60 = memref.load %arg6[%c2_42] : memref<4xf32, #tpu.memory_space<smem>>
    %61 = vector.broadcast %60 : f32 to vector<8x128xf32>
    %c3_43 = arith.constant 3 : index
    %62 = memref.load %arg6[%c3_43] : memref<4xf32, #tpu.memory_space<smem>>
    %63 = vector.broadcast %62 : f32 to vector<8x128xf32>
    %c0_44 = arith.constant 0 : index
    %64 = memref.load %arg7[%c0_44] : memref<1xf32, #tpu.memory_space<smem>>
    %65 = vector.broadcast %64 : f32 to vector<8x128xf32>
    %c0_i32 = arith.constant 0 : i32
    %c8_i32 = arith.constant 8 : i32
    %66 = arith.muli %c0_i32, %c8_i32 : i32
    %67 = tpu.assume_multiple %66, 8 : i32
    %68 = arith.index_cast %67 : i32 to index
    %c0_45 = arith.constant 0 : index
    %69 = vector.load %arg1[%68, %c0_45] : memref<8x128xf32, #tpu.memory_space<vmem>>, vector<8x128xf32>
    %70 = arith.mulf %1, %69 : vector<8x128xf32>
    %71 = arith.addf %70, %9 : vector<8x128xf32>
    %cst = arith.constant 0.000000e+00 : f32
    %72 = vector.broadcast %cst : f32 to vector<8x128xf32>
    %73 = arith.maximumf %71, %72 : vector<8x128xf32>
    %74 = arith.mulf %3, %69 : vector<8x128xf32>
    %75 = arith.addf %74, %11 : vector<8x128xf32>
    %cst_46 = arith.constant 0.000000e+00 : f32
    %76 = vector.broadcast %cst_46 : f32 to vector<8x128xf32>
    %77 = arith.maximumf %75, %76 : vector<8x128xf32>
    %78 = arith.mulf %5, %69 : vector<8x128xf32>
    %79 = arith.addf %78, %13 : vector<8x128xf32>
    %cst_47 = arith.constant 0.000000e+00 : f32
    %80 = vector.broadcast %cst_47 : f32 to vector<8x128xf32>
    %81 = arith.maximumf %79, %80 : vector<8x128xf32>
    %82 = arith.mulf %7, %69 : vector<8x128xf32>
    %83 = arith.addf %82, %15 : vector<8x128xf32>
    %cst_48 = arith.constant 0.000000e+00 : f32
    %84 = vector.broadcast %cst_48 : f32 to vector<8x128xf32>
    %85 = arith.maximumf %83, %84 : vector<8x128xf32>
    %86 = arith.mulf %17, %73 : vector<8x128xf32>
    %87 = arith.mulf %19, %77 : vector<8x128xf32>
    %88 = arith.mulf %21, %81 : vector<8x128xf32>
    %89 = arith.mulf %23, %85 : vector<8x128xf32>
    %90 = arith.addf %86, %87 : vector<8x128xf32>
    %91 = arith.addf %88, %89 : vector<8x128xf32>
    %92 = arith.addf %90, %91 : vector<8x128xf32>
    %93 = arith.addf %92, %49 : vector<8x128xf32>
    %cst_49 = arith.constant 0.000000e+00 : f32
    %94 = vector.broadcast %cst_49 : f32 to vector<8x128xf32>
    %95 = arith.maximumf %93, %94 : vector<8x128xf32>
    %96 = arith.mulf %25, %73 : vector<8x128xf32>
    %97 = arith.mulf %27, %77 : vector<8x128xf32>
    %98 = arith.mulf %29, %81 : vector<8x128xf32>
    %99 = arith.mulf %31, %85 : vector<8x128xf32>
    %100 = arith.addf %96, %97 : vector<8x128xf32>
    %101 = arith.addf %98, %99 : vector<8x128xf32>
    %102 = arith.addf %100, %101 : vector<8x128xf32>
    %103 = arith.addf %102, %51 : vector<8x128xf32>
    %cst_50 = arith.constant 0.000000e+00 : f32
    %104 = vector.broadcast %cst_50 : f32 to vector<8x128xf32>
    %105 = arith.maximumf %103, %104 : vector<8x128xf32>
    %106 = arith.mulf %33, %73 : vector<8x128xf32>
    %107 = arith.mulf %35, %77 : vector<8x128xf32>
    %108 = arith.mulf %37, %81 : vector<8x128xf32>
    %109 = arith.mulf %39, %85 : vector<8x128xf32>
    %110 = arith.addf %106, %107 : vector<8x128xf32>
    %111 = arith.addf %108, %109 : vector<8x128xf32>
    %112 = arith.addf %110, %111 : vector<8x128xf32>
    %113 = arith.addf %112, %53 : vector<8x128xf32>
    %cst_51 = arith.constant 0.000000e+00 : f32
    %114 = vector.broadcast %cst_51 : f32 to vector<8x128xf32>
    %115 = arith.maximumf %113, %114 : vector<8x128xf32>
    %116 = arith.mulf %41, %73 : vector<8x128xf32>
    %117 = arith.mulf %43, %77 : vector<8x128xf32>
    %118 = arith.mulf %45, %81 : vector<8x128xf32>
    %119 = arith.mulf %47, %85 : vector<8x128xf32>
    %120 = arith.addf %116, %117 : vector<8x128xf32>
    %121 = arith.addf %118, %119 : vector<8x128xf32>
    %122 = arith.addf %120, %121 : vector<8x128xf32>
    %123 = arith.addf %122, %55 : vector<8x128xf32>
    %cst_52 = arith.constant 0.000000e+00 : f32
    %124 = vector.broadcast %cst_52 : f32 to vector<8x128xf32>
    %125 = arith.maximumf %123, %124 : vector<8x128xf32>
    %126 = arith.mulf %57, %95 : vector<8x128xf32>
    %127 = arith.mulf %59, %105 : vector<8x128xf32>
    %128 = arith.mulf %61, %115 : vector<8x128xf32>
    %129 = arith.mulf %63, %125 : vector<8x128xf32>
    %130 = arith.addf %126, %127 : vector<8x128xf32>
    %131 = arith.addf %128, %129 : vector<8x128xf32>
    %132 = arith.addf %130, %131 : vector<8x128xf32>
    %133 = arith.addf %132, %65 : vector<8x128xf32>
    %134 = arith.index_cast %67 : i32 to index
    %c0_53 = arith.constant 0 : index
    %135 = vector.load %arg8[%134, %c0_53] : memref<8x128xf32, #tpu.memory_space<vmem>>, vector<8x128xf32>
    tpu.vector_store %arg8[%134, %c0_53], %133 {strides = array<i32>} : memref<8x128xf32, #tpu.memory_space<vmem>>, vector<8x128xf32>,
    %c1_i32 = arith.constant 1 : i32
    return
  }
  func.func @transform_0(%arg0: i32) -> (i32, i32) {
    %c0_i32 = arith.constant 0 : i32
    %c0_i32_0 = arith.constant 0 : i32
    return %arg0, %c0_i32 : i32, i32
  }
  func.func @transform_1(%arg0: i32) -> i32 {
    %c0_i32 = arith.constant 0 : i32
    %c0_i32_0 = arith.constant 0 : i32
    return %c0_i32 : i32
  }
  func.func @transform_2(%arg0: i32) -> i32 {
    %c0_i32 = arith.constant 0 : i32
    %c0_i32_0 = arith.constant 0 : i32
    return %c0_i32 : i32
  }
  func.func @transform_3(%arg0: i32) -> (i32, i32) {
    %c0_i32 = arith.constant 0 : i32
    %c0_i32_0 = arith.constant 0 : i32
    %c0_i32_1 = arith.constant 0 : i32
    return %c0_i32, %c0_i32_0 : i32, i32
  }
  func.func @transform_4(%arg0: i32) -> i32 {
    %c0_i32 = arith.constant 0 : i32
    %c0_i32_0 = arith.constant 0 : i32
    return %c0_i32 : i32
  }
  func.func @transform_5(%arg0: i32) -> i32 {
    %c0_i32 = arith.constant 0 : i32
    %c0_i32_0 = arith.constant 0 : i32
    return %c0_i32 : i32
  }
  func.func @transform_6(%arg0: i32) -> i32 {
    %c0_i32 = arith.constant 0 : i32
    %c0_i32_0 = arith.constant 0 : i32
    return %c0_i32 : i32
  }
  func.func @transform_7(%arg0: i32) -> (i32, i32) {
    %c0_i32 = arith.constant 0 : i32
    %c0_i32_0 = arith.constant 0 : i32
    return %arg0, %c0_i32 : i32, i32
  }
}

</mosaic_0001>

<llo_original>
// kernel: tpu_custom_call.1
$region0: #{tpu_custom_call.1}
  #allocation0 [shape = 'u32[]', space=smem, size = 0x4, offset = 0x4, fixed_abs, tag = 'smem constant byte address 0x4 - core index']
  #allocation1 [shape = 'u32[144,128]{1,0:T(1,128)}', space=vmem, size = 0x12000, scoped, tag = 'internal scratch']
  #allocation2 [shape = 'f32[1]{0:T(128)S(6)}', space=smem, size = 0x200, scoped, tag = 'scoped memory for tpu_custom_call.1']
  %s0 = inlined_call_operand.hbm [shape: f32[16,128], index: 0, kind: input, shape index: {}]
  %s1 = inlined_call_operand.vmem [shape: f32[4], index: 1, kind: input, shape index: {}]
  %s2 = inlined_call_operand.vmem [shape: f32[4], index: 2, kind: input, shape index: {}]
  %s3 = inlined_call_operand.vmem [shape: f32[4,4], index: 3, kind: input, shape index: {}]
  %s4 = inlined_call_operand.vmem [shape: f32[4], index: 4, kind: input, shape index: {}]
  %s5 = inlined_call_operand.vmem [shape: f32[4], index: 5, kind: input, shape index: {}]
  %s6 = inlined_call_operand.<no memory space> [shape: f32[1], index: 6, kind: input, shape index: {}]
  %s7 = inlined_call_operand.hbm [shape: f32[16,128], index: 7, kind: output, shape index: {}]
  %s8 = sld [smem:[#allocation0]]
  $region85: #{tpu_custom_call.1} parent=0
    _
  %s10 = ssub.s32 1, %s8
  %s11 = scalar_select 0, %s10, %s8
  %12 = sst [smem:[#allocation2]] %s6
  $region1: #{tpu_custom_call.1} parent=0
    #allocation3 [shape = 'u8[8192]{0}', space=vmem, size = 0x2000, scoped, tag = 'input window, operand 0']
    #allocation4 [shape = 's32[2]{0}', space=sflag, size = 0x8, scoped, tag = 'scoped memory for tpu_custom_call.1']
    #allocation5 [shape = 's32[2]{0}', space=sflag, size = 0x8, scoped, tag = 'scoped memory for tpu_custom_call.1']
    #allocation6 [shape = 's32[2]{0}', space=sflag, size = 0x8, scoped, tag = 'scoped memory for tpu_custom_call.1']
    #allocation7 [shape = 'u8[512]{0}', space=smem, size = 0x200, scoped, tag = 'input window, operand 1, single buffered']
    #allocation8 [shape = 'u8[512]{0}', space=smem, size = 0x200, scoped, tag = 'input window, operand 2, single buffered']
    #allocation9 [shape = 's32[1]{0}', space=sflag, size = 0x4, scoped, tag = 'scoped memory for tpu_custom_call.1']
    #allocation10 [shape = 'u8[2048]{0}', space=smem, size = 0x800, scoped, tag = 'input window, operand 3, single buffered']
    #allocation11 [shape = 'u8[512]{0}', space=smem, size = 0x200, scoped, tag = 'input window, operand 4, single buffered']
    #allocation12 [shape = 's32[1]{0}', space=sflag, size = 0x4, scoped, tag = 'scoped memory for tpu_custom_call.1']
    #allocation13 [shape = 'u8[512]{0}', space=smem, size = 0x200, scoped, tag = 'input window, operand 5, single buffered']
    #allocation14 [shape = 'u8[8192]{0}', space=vmem, size = 0x2000, scoped, tag = 'output window, operand 0']
    %13 = vsyncpa [#allocation4], 0
    %s14 = scalar_lea.sflag [#allocation4], 1
    %15 = vsyncpa %s14, 0
    %16 = vsyncpa [#allocation6], 0
    %17 = vsyncpa [#allocation9], 0
    %18 = vsyncpa [#allocation12], 0
    %19 = vsyncpa [#allocation5], 0
    %s20 = scalar_lea.sflag [#allocation5], 1
    %21 = vsyncpa %s20, 0
    loop: start=0, step=1, limit=4
    $region2: #{tpu_custom_call.1} parent=1 // loop_pre_header
      _
    $region3: #{tpu_custom_call.1} parent=1 // loop_header
      %s23 = sphi 0, %s27
      %p24 = scmp.ge.s32.totalorder %s23, 4
      %s33 = sphi 0, %s35
      %s36 = sphi 0, %s33
      %s37 = sphi 0, %s36
      %s53 = sphi 0, %s37
      %s57 = sphi 0, %s57
      %s59 = sphi 0, %s57
      %s60 = sphi 0, %s59
      %s74 = sphi 0, %s60
      %s78 = sphi 0, %s78
      %s80 = sphi 0, %s78
      %s81 = sphi 0, %s80
      %s95 = sphi 0, %s81
      %s99 = sphi 0, %s99
      %s101 = sphi 0, %s99
      %s102 = sphi 0, %s101
      %s116 = sphi 0, %s102
      %s120 = sphi 0, %s120
      %s122 = sphi 0, %s120
      %s123 = sphi 0, %s122
      %s137 = sphi 0, %s123
      %s141 = sphi 0, %s141
      %s143 = sphi 0, %s141
      %s144 = sphi 0, %s143
      %s158 = sphi 0, %s144
      %s162 = sphi 0, %s162
      %s164 = sphi 0, %s162
      %s165 = sphi 0, %s164
      %s179 = sphi 0, %s165
      %s185 = sphi 0, %s187
      %s188 = sphi 0, %s185
      %s189 = sphi 0, %s188
      %s205 = sphi 0, %s189
    $region4: #{tpu_custom_call.1} parent=1 // loop_header_branch
      %26 = sbr.rel (%p24) target = $region8
    $region5: #{tpu_custom_call.1} parent=1 // loop_body
      %s28 = ssub.s32 %s23, 1
      %s29 = ssub.s32 %s23, 2
      %s30 = sadd.s32 %s23, 1
      %s31 = ssub.s32 %s23, %s30
      %p32 = scmp.eq.s32.totalorder %s31, 0
      %s34 = sadd.s32 %s33, 1
      %s35 = scalar_select %p32, %s33, %s34
      %p38 = pneg %p32
      %p39 = scmp.eq.s32.totalorder %s23, 1
      %p40 = por %p38, %p39
      %p41 = scmp.ne.s32.totalorder %s33, %s36
      %p42 = scmp.eq.s32.totalorder %s23, 0
      %p43 = por %p41, %p42
      %p44 = scmp.ne.s32.totalorder %s33, %s36
      %p45 = scmp.eq.s32.totalorder %s28, 1
      %p46 = por %p44, %p45
      %p47 = scmp.ne.s32.totalorder %s36, %s37
      %p48 = scmp.eq.s32.totalorder %s28, 0
      %p49 = por %p47, %p48
      %p50 = scmp.ne.s32.totalorder %s36, %s37
      %p51 = scmp.eq.s32.totalorder %s29, 1
      %p52 = por %p50, %p51
      %p54 = scmp.ne.s32.totalorder %s37, %s53
      %p55 = scmp.eq.s32.totalorder %s29, 0
      %p56 = por %p54, %p55
      %s58 = sadd.s32 %s57, 1
      %p61 = scmp.eq.s32.totalorder %s23, 1
      %p62 = scmp.ne.s32.totalorder %s57, %s59
      %p63 = scmp.eq.s32.totalorder %s23, 0
      %p64 = por %p62, %p63
      %p65 = scmp.ne.s32.totalorder %s57, %s59
      %p66 = scmp.eq.s32.totalorder %s28, 1
      %p67 = por %p65, %p66
      %p68 = scmp.ne.s32.totalorder %s59, %s60
      %p69 = scmp.eq.s32.totalorder %s28, 0
      %p70 = por %p68, %p69
      %p71 = scmp.ne.s32.totalorder %s59, %s60
      %p72 = scmp.eq.s32.totalorder %s29, 1
      %p73 = por %p71, %p72
      %p75 = scmp.ne.s32.totalorder %s60, %s74
      %p76 = scmp.eq.s32.totalorder %s29, 0
      %p77 = por %p75, %p76
      %s79 = sadd.s32 %s78, 1
      %p82 = scmp.eq.s32.totalorder %s23, 1
      %p83 = scmp.ne.s32.totalorder %s78, %s80
      %p84 = scmp.eq.s32.totalorder %s23, 0
      %p85 = por %p83, %p84
      %p86 = scmp.ne.s32.totalorder %s78, %s80
      %p87 = scmp.eq.s32.totalorder %s28, 1
      %p88 = por %p86, %p87
      %p89 = scmp.ne.s32.totalorder %s80, %s81
      %p90 = scmp.eq.s32.totalorder %s28, 0
      %p91 = por %p89, %p90
      %p92 = scmp.ne.s32.totalorder %s80, %s81
      %p93 = scmp.eq.s32.totalorder %s29, 1
      %p94 = por %p92, %p93
      %p96 = scmp.ne.s32.totalorder %s81, %s95
      %p97 = scmp.eq.s32.totalorder %s29, 0
      %p98 = por %p96, %p97
      %s100 = sadd.s32 %s99, 1
      %p103 = scmp.eq.s32.totalorder %s23, 1
      %p104 = scmp.ne.s32.totalorder %s99, %s101
      %p105 = scmp.eq.s32.totalorder %s23, 0
      %p106 = por %p104, %p105
      %p107 = scmp.ne.s32.totalorder %s99, %s101
      %p108 = scmp.eq.s32.totalorder %s28, 1
      %p109 = por %p107, %p108
      %p110 = scmp.ne.s32.totalorder %s101, %s102
      %p111 = scmp.eq.s32.totalorder %s28, 0
      %p112 = por %p110, %p111
      %p113 = scmp.ne.s32.totalorder %s101, %s102
      %p114 = scmp.eq.s32.totalorder %s29, 1
      %p115 = por %p113, %p114
      %p117 = scmp.ne.s32.totalorder %s102, %s116
      %p118 = scmp.eq.s32.totalorder %s29, 0
      %p119 = por %p117, %p118
      %s121 = sadd.s32 %s120, 1
      %p124 = scmp.eq.s32.totalorder %s23, 1
      %p125 = scmp.ne.s32.totalorder %s120, %s122
      %p126 = scmp.eq.s32.totalorder %s23, 0
      %p127 = por %p125, %p126
      %p128 = scmp.ne.s32.totalorder %s120, %s122
      %p129 = scmp.eq.s32.totalorder %s28, 1
      %p130 = por %p128, %p129
      %p131 = scmp.ne.s32.totalorder %s122, %s123
      %p132 = scmp.eq.s32.totalorder %s28, 0
      %p133 = por %p131, %p132
      %p134 = scmp.ne.s32.totalorder %s122, %s123
      %p135 = scmp.eq.s32.totalorder %s29, 1
      %p136 = por %p134, %p135
      %p138 = scmp.ne.s32.totalorder %s123, %s137
      %p139 = scmp.eq.s32.totalorder %s29, 0
      %p140 = por %p138, %p139
      %s142 = sadd.s32 %s141, 1
      %p145 = scmp.eq.s32.totalorder %s23, 1
      %p146 = scmp.ne.s32.totalorder %s141, %s143
      %p147 = scmp.eq.s32.totalorder %s23, 0
      %p148 = por %p146, %p147
      %p149 = scmp.ne.s32.totalorder %s141, %s143
      %p150 = scmp.eq.s32.totalorder %s28, 1
      %p151 = por %p149, %p150
      %p152 = scmp.ne.s32.totalorder %s143, %s144
      %p153 = scmp.eq.s32.totalorder %s28, 0
      %p154 = por %p152, %p153
      %p155 = scmp.ne.s32.totalorder %s143, %s144
      %p156 = scmp.eq.s32.totalorder %s29, 1
      %p157 = por %p155, %p156
      %p159 = scmp.ne.s32.totalorder %s144, %s158
      %p160 = scmp.eq.s32.totalorder %s29, 0
      %p161 = por %p159, %p160
      %s163 = sadd.s32 %s162, 1
      %p166 = scmp.eq.s32.totalorder %s23, 1
      %p167 = scmp.ne.s32.totalorder %s162, %s164
      %p168 = scmp.eq.s32.totalorder %s23, 0
      %p169 = por %p167, %p168
      %p170 = scmp.ne.s32.totalorder %s162, %s164
      %p171 = scmp.eq.s32.totalorder %s28, 1
      %p172 = por %p170, %p171
      %p173 = scmp.ne.s32.totalorder %s164, %s165
      %p174 = scmp.eq.s32.totalorder %s28, 0
      %p175 = por %p173, %p174
      %p176 = scmp.ne.s32.totalorder %s164, %s165
      %p177 = scmp.eq.s32.totalorder %s29, 1
      %p178 = por %p176, %p177
      %p180 = scmp.ne.s32.totalorder %s165, %s179
      %p181 = scmp.eq.s32.totalorder %s29, 0
      %p182 = por %p180, %p181
      %s183 = ssub.s32 %s23, %s30
      %p184 = scmp.eq.s32.totalorder %s183, 0
      %s186 = sadd.s32 %s185, 1
      %s187 = scalar_select %p184, %s185, %s186
      %p190 = pneg %p184
      %p191 = scmp.eq.s32.totalorder %s23, 1
      %p192 = por %p190, %p191
      %p193 = scmp.ne.s32.totalorder %s185, %s188
      %p194 = scmp.eq.s32.totalorder %s23, 0
      %p195 = por %p193, %p194
      %p196 = scmp.ne.s32.totalorder %s185, %s188
      %p197 = scmp.eq.s32.totalorder %s28, 1
      %p198 = por %p196, %p197
      %p199 = scmp.ne.s32.totalorder %s188, %s189
      %p200 = scmp.eq.s32.totalorder %s28, 0
      %p201 = por %p199, %p200
      %p202 = scmp.ne.s32.totalorder %s188, %s189
      %p203 = scmp.eq.s32.totalorder %s29, 1
      %p204 = por %p202, %p203
      %p206 = scmp.ne.s32.totalorder %s189, %s205
      %p207 = scmp.eq.s32.totalorder %s29, 0
      %p208 = por %p206, %p207
      %p209 = scmp.le.s32.totalorder 1, %s23
      %p210 = scmp.lt.s32.totalorder %s23, 3
      %p211 = pnand %p209, %p210
      %p212 = pneg %p211
      // Predicated region
      $region9: #{tpu_custom_call.1} parent=5 // pred_check
        _
      $region10: #{tpu_custom_call.1} parent=5 // pred_check_branch
        %214 = sbr.rel (%p211) target = $region12
      $region11: #{tpu_custom_call.1} parent=5 // pred_region
        %s215 = ssub.s32 %s23, 1
        // Predicated region
        $region13: #{tpu_custom_call.1} parent=11 // pred_check
          %p216 = pneg %p70
        $region14: #{tpu_custom_call.1} parent=11 // pred_check_branch
          %218 = sbr.rel (%p216) target = $region16
        $region15: #{tpu_custom_call.1} parent=11 // pred_region
          %s220 = ssub.s32 16, 16
          %221 = vsyncadd [#allocation6], %s220
          %s223 = sshll.u32 %s1, 4
          %s224 = int_to_ptr.vmem [resolvable:$true] %s223
          %226 = dma.vmem_to_smem %s224, 16, [#allocation7], [#allocation6]
        $region16: #{tpu_custom_call.1} parent=11 // pred_fallthru
          _
        // Predicated region
        $region17: #{tpu_custom_call.1} parent=11 // pred_check
          %p227 = pneg %p91
        $region18: #{tpu_custom_call.1} parent=11 // pred_check_branch
          %229 = sbr.rel (%p227) target = $region20
        $region19: #{tpu_custom_call.1} parent=11 // pred_region
          %s231 = ssub.s32 16, 16
          %232 = vsyncadd [#allocation9], %s231
          %s234 = sshll.u32 %s2, 4
          %s235 = int_to_ptr.vmem [resolvable:$true] %s234
          %237 = dma.vmem_to_smem %s235, 16, [#allocation8], [#allocation9]
        $region20: #{tpu_custom_call.1} parent=11 // pred_fallthru
          _
        // Predicated region
        $region21: #{tpu_custom_call.1} parent=11 // pred_check
          %p238 = pneg %p112
        $region22: #{tpu_custom_call.1} parent=11 // pred_check_branch
          %240 = sbr.rel (%p238) target = $region24
        $region23: #{tpu_custom_call.1} parent=11 // pred_region
          %s242 = ssub.s32 64, 64
          %243 = vsyncadd [#allocation9], %s242
          %s245 = sshll.u32 %s3, 4
          %s246 = int_to_ptr.vmem [resolvable:$true] %s245
          %248 = dma.vmem_to_smem %s246, 64, [#allocation10], [#allocation9]
        $region24: #{tpu_custom_call.1} parent=11 // pred_fallthru
          _
        // Predicated region
        $region25: #{tpu_custom_call.1} parent=11 // pred_check
          %p249 = pneg %p133
        $region26: #{tpu_custom_call.1} parent=11 // pred_check_branch
          %251 = sbr.rel (%p249) target = $region28
        $region27: #{tpu_custom_call.1} parent=11 // pred_region
          %s253 = ssub.s32 16, 16
          %254 = vsyncadd [#allocation12], %s253
          %s256 = sshll.u32 %s4, 4
          %s257 = int_to_ptr.vmem [resolvable:$true] %s256
          %259 = dma.vmem_to_smem %s257, 16, [#allocation11], [#allocation12]
        $region28: #{tpu_custom_call.1} parent=11 // pred_fallthru
          _
        // Predicated region
        $region29: #{tpu_custom_call.1} parent=11 // pred_check
          %p260 = pneg %p154
        $region30: #{tpu_custom_call.1} parent=11 // pred_check_branch
          %262 = sbr.rel (%p260) target = $region32
        $region31: #{tpu_custom_call.1} parent=11 // pred_region
          %s264 = ssub.s32 16, 16
          %265 = vsyncadd [#allocation12], %s264
          %s267 = sshll.u32 %s5, 4
          %s268 = int_to_ptr.vmem [resolvable:$true] %s267
          %270 = dma.vmem_to_smem %s268, 16, [#allocation13], [#allocation12]
        $region32: #{tpu_custom_call.1} parent=11 // pred_fallthru
          _
        // Predicated region
        $region33: #{tpu_custom_call.1} parent=11 // pred_check
          %p271 = pneg %p175
        $region34: #{tpu_custom_call.1} parent=11 // pred_check_branch
          %273 = sbr.rel (%p271) target = $region36
        $region35: #{tpu_custom_call.1} parent=11 // pred_region
          _
        $region36: #{tpu_custom_call.1} parent=11 // pred_fallthru
          _
      $region12: #{tpu_custom_call.1} parent=5 // pred_fallthru
        _
      %p274 = scmp.lt.s32.totalorder %s23, 2
      // Predicated region
      $region37: #{tpu_custom_call.1} parent=5 // pred_check
        %p275 = pneg %p274
      $region38: #{tpu_custom_call.1} parent=5 // pred_check_branch
        %277 = sbr.rel (%p275) target = $region40
      $region39: #{tpu_custom_call.1} parent=5 // pred_region
        // Predicated region
        $region41: #{tpu_custom_call.1} parent=39 // pred_check
          %p278 = pneg %p43
        $region42: #{tpu_custom_call.1} parent=39 // pred_check_branch
          %280 = sbr.rel (%p278) target = $region44
        $region43: #{tpu_custom_call.1} parent=39 // pred_region
          %s281 = sand.u32 %s33, 1
          %s282 = scalar_lea.sflag [#allocation4], %s281
          %s283 = sand.u32 %s33, 1
          %s284 = smul.addr %s283, 8
          %s285 = scalar_lea.vmem [#allocation3], %s284
          %s287 = ssub.s32 128, 128
          %288 = vsyncadd %s282, %s287
          %s289 = smul.addr %s23, 128
          %s290 = scalar_lea.hbm %s0, %s289
          %s292 = sshll.u32 %s285, 4
          %s293 = int_to_ptr.vmem [resolvable:$true] %s292
          %295 = dma.hbm_to_vmem [thread:$0]  %s290, 128, %s293, %s282
        $region44: #{tpu_custom_call.1} parent=39 // pred_fallthru
          _
      $region40: #{tpu_custom_call.1} parent=5 // pred_fallthru
        _
      %p296 = scmp.le.s32.totalorder 1, %s23
      %p297 = scmp.lt.s32.totalorder %s23, 3
      %p298 = pnand %p296, %p297
      %p299 = pneg %p298
      // Predicated region
      $region45: #{tpu_custom_call.1} parent=5 // pred_check
        _
      $region46: #{tpu_custom_call.1} parent=5 // pred_check_branch
        %301 = sbr.rel (%p298) target = $region48
      $region47: #{tpu_custom_call.1} parent=5 // pred_region
        %s302 = ssub.s32 %s23, 1
        %s303 = sand.u32 %s36, 1
        %s304 = scalar_lea.sflag [#allocation4], %s303
        %s305 = sand.u32 %s36, 1
        %s306 = smul.addr %s305, 8
        %s307 = scalar_lea.vmem [#allocation3], %s306
        // Predicated region
        $region49: #{tpu_custom_call.1} parent=47 // pred_check
          %p308 = pneg %p49
        $region50: #{tpu_custom_call.1} parent=47 // pred_check_branch
          %310 = sbr.rel (%p308) target = $region52
        $region51: #{tpu_custom_call.1} parent=47 // pred_region
          %311 = dma.done %s304, 128
        $region52: #{tpu_custom_call.1} parent=47 // pred_fallthru
          _
        // Predicated region
        $region53: #{tpu_custom_call.1} parent=47 // pred_check
          %p312 = pneg %p70
        $region54: #{tpu_custom_call.1} parent=47 // pred_check_branch
          %314 = sbr.rel (%p312) target = $region56
        $region55: #{tpu_custom_call.1} parent=47 // pred_region
          %315 = dma.done [#allocation6], 16
        $region56: #{tpu_custom_call.1} parent=47 // pred_fallthru
          _
        // Predicated region
        $region57: #{tpu_custom_call.1} parent=47 // pred_check
          %p316 = pneg %p91
        $region58: #{tpu_custom_call.1} parent=47 // pred_check_branch
          %318 = sbr.rel (%p316) target = $region60
        $region59: #{tpu_custom_call.1} parent=47 // pred_region
          %319 = dma.done [#allocation9], 16
        $region60: #{tpu_custom_call.1} parent=47 // pred_fallthru
          _
        // Predicated region
        $region61: #{tpu_custom_call.1} parent=47 // pred_check
          %p320 = pneg %p112
        $region62: #{tpu_custom_call.1} parent=47 // pred_check_branch
          %322 = sbr.rel (%p320) target = $region64
        $region63: #{tpu_custom_call.1} parent=47 // pred_region
          %323 = dma.done [#allocation9], 64
        $region64: #{tpu_custom_call.1} parent=47 // pred_fallthru
          _
        // Predicated region
        $region65: #{tpu_custom_call.1} parent=47 // pred_check
          %p324 = pneg %p133
        $region66: #{tpu_custom_call.1} parent=47 // pred_check_branch
          %326 = sbr.rel (%p324) target = $region68
        $region67: #{tpu_custom_call.1} parent=47 // pred_region
          %327 = dma.done [#allocation12], 16
        $region68: #{tpu_custom_call.1} parent=47 // pred_fallthru
          _
        // Predicated region
        $region69: #{tpu_custom_call.1} parent=47 // pred_check
          %p328 = pneg %p154
        $region70: #{tpu_custom_call.1} parent=47 // pred_check_branch
          %330 = sbr.rel (%p328) target = $region72
        $region71: #{tpu_custom_call.1} parent=47 // pred_region
          %331 = dma.done [#allocation12], 16
        $region72: #{tpu_custom_call.1} parent=47 // pred_fallthru
          _
        %332 = sfence
        %s333 = sand.u32 %s36, 1
        %s334 = scalar_lea.sflag [#allocation4], %s333
        %s335 = sand.u32 %s36, 1
        %s336 = smul.addr %s335, 8
        %s337 = scalar_lea.vmem [#allocation3], %s336
        %p338 = pneg %p49
        %p339 = pneg %p46
        %p340 = pneg %p70
        %p341 = pneg %p67
        %p342 = pneg %p91
        %p343 = pneg %p88
        %p344 = pneg %p112
        %p345 = pneg %p109
        %p346 = pneg %p133
        %p347 = pneg %p130
        %p348 = pneg %p154
        %p349 = pneg %p151
        %p350 = pneg %p175
        %p351 = pneg %p172
        %p352 = pneg %p201
        %p353 = pneg %p198
        %s354 = sand.u32 %s188, 1
        %s355 = scalar_lea.sflag [#allocation5], %s354
        %s356 = sand.u32 %s188, 1
        %s357 = smul.addr %s356, 8
        %s358 = scalar_lea.vmem [#allocation14], %s357
        %s359 = sld [smem:[#allocation7]]
        %v360 = vstv %s359
        %s361 = sld [smem:[#allocation7 + $0x1]]
        %v362 = vstv %s361
        %s363 = sld [smem:[#allocation7 + $0x2]]
        %v364 = vstv %s363
        %s365 = sld [smem:[#allocation7 + $0x3]]
        %v366 = vstv %s365
        %s367 = sld [smem:[#allocation8]]
        %v368 = vstv %s367
        %s369 = sld [smem:[#allocation8 + $0x1]]
        %v370 = vstv %s369
        %s371 = sld [smem:[#allocation8 + $0x2]]
        %v372 = vstv %s371
        %s373 = sld [smem:[#allocation8 + $0x3]]
        %v374 = vstv %s373
        %s375 = sld [smem:[#allocation10]]
        %v376 = vstv %s375
        %s377 = sld [smem:[#allocation10 + $0x1]]
        %v378 = vstv %s377
        %s379 = sld [smem:[#allocation10 + $0x2]]
        %v380 = vstv %s379
        %s381 = sld [smem:[#allocation10 + $0x3]]
        %v382 = vstv %s381
        %s383 = sld [smem:[#allocation10 + $0x80]]
        %v384 = vstv %s383
        %s385 = sld [smem:[#allocation10 + $0x81]]
        %v386 = vstv %s385
        %s387 = sld [smem:[#allocation10 + $0x82]]
        %v388 = vstv %s387
        %s389 = sld [smem:[#allocation10 + $0x83]]
        %v390 = vstv %s389
        %s391 = sld [smem:[#allocation10 + $0x100]]
        %v392 = vstv %s391
        %s393 = sld [smem:[#allocation10 + $0x101]]
        %v394 = vstv %s393
        %s395 = sld [smem:[#allocation10 + $0x102]]
        %v396 = vstv %s395
        %s397 = sld [smem:[#allocation10 + $0x103]]
        %v398 = vstv %s397
        %s399 = sld [smem:[#allocation10 + $0x180]]
        %v400 = vstv %s399
        %s401 = sld [smem:[#allocation10 + $0x181]]
        %v402 = vstv %s401
        %s403 = sld [smem:[#allocation10 + $0x182]]
        %v404 = vstv %s403
        %s405 = sld [smem:[#allocation10 + $0x183]]
        %v406 = vstv %s405
        %s407 = sld [smem:[#allocation11]]
        %v408 = vstv %s407
        %s409 = sld [smem:[#allocation11 + $0x1]]
        %v410 = vstv %s409
        %s411 = sld [smem:[#allocation11 + $0x2]]
        %v412 = vstv %s411
        %s413 = sld [smem:[#allocation11 + $0x3]]
        %v414 = vstv %s413
        %s415 = sld [smem:[#allocation13]]
        %v416 = vstv %s415
        %s417 = sld [smem:[#allocation13 + $0x1]]
        %v418 = vstv %s417
        %s419 = sld [smem:[#allocation13 + $0x2]]
        %v420 = vstv %s419
        %s421 = sld [smem:[#allocation13 + $0x3]]
        %v422 = vstv %s421
        %s423 = sld [smem:[#allocation2]]
        %v424 = vstv %s423
        %v425 = vld [vmem:[%s307] sm:$0xff]
        %v426 = vmul.f32 %v360, %v425
        %v427 = vadd.f32 %v426, %v368
        %v428 = vmax.f32 %v427, 0.0
        %v429 = vmul.f32 %v362, %v425
        %v430 = vadd.f32 %v429, %v370
        %v431 = vmax.f32 %v430, 0.0
        %v432 = vmul.f32 %v364, %v425
        %v433 = vadd.f32 %v432, %v372
        %v434 = vmax.f32 %v433, 0.0
        %v435 = vmul.f32 %v366, %v425
        %v436 = vadd.f32 %v435, %v374
        %v437 = vmax.f32 %v436, 0.0
        %v438 = vmul.f32 %v376, %v428
        %v439 = vmul.f32 %v378, %v431
        %v440 = vmul.f32 %v380, %v434
        %v441 = vmul.f32 %v382, %v437
        %v442 = vadd.f32 %v438, %v439
        %v443 = vadd.f32 %v440, %v441
        %v444 = vadd.f32 %v442, %v443
        %v445 = vadd.f32 %v444, %v408
        %v446 = vmax.f32 %v445, 0.0
        %v447 = vmul.f32 %v384, %v428
        %v448 = vmul.f32 %v386, %v431
        %v449 = vmul.f32 %v388, %v434
        %v450 = vmul.f32 %v390, %v437
        %v451 = vadd.f32 %v447, %v448
        %v452 = vadd.f32 %v449, %v450
        %v453 = vadd.f32 %v451, %v452
        %v454 = vadd.f32 %v453, %v410
        %v455 = vmax.f32 %v454, 0.0
        %v456 = vmul.f32 %v392, %v428
        %v457 = vmul.f32 %v394, %v431
        %v458 = vmul.f32 %v396, %v434
        %v459 = vmul.f32 %v398, %v437
        %v460 = vadd.f32 %v456, %v457
        %v461 = vadd.f32 %v458, %v459
        %v462 = vadd.f32 %v460, %v461
        %v463 = vadd.f32 %v462, %v412
        %v464 = vmax.f32 %v463, 0.0
        %v465 = vmul.f32 %v400, %v428
        %v466 = vmul.f32 %v402, %v431
        %v467 = vmul.f32 %v404, %v434
        %v468 = vmul.f32 %v406, %v437
        %v469 = vadd.f32 %v465, %v466
        %v470 = vadd.f32 %v467, %v468
        %v471 = vadd.f32 %v469, %v470
        %v472 = vadd.f32 %v471, %v414
        %v473 = vmax.f32 %v472, 0.0
        %v474 = vmul.f32 %v416, %v446
        %v475 = vmul.f32 %v418, %v455
        %v476 = vmul.f32 %v420, %v464
        %v477 = vmul.f32 %v422, %v473
        %v478 = vadd.f32 %v474, %v475
        %v479 = vadd.f32 %v476, %v477
        %v480 = vadd.f32 %v478, %v479
        %v481 = vadd.f32 %v480, %v424
        %482 = vst [vmem:[%s358] sm:$0xff] %v481
        %s483 = sand.u32 %s188, 1
        %s484 = scalar_lea.sflag [#allocation5], %s483
        %s485 = sand.u32 %s188, 1
        %s486 = smul.addr %s485, 8
        %s487 = scalar_lea.vmem [#allocation14], %s486
        // Predicated region
        $region73: #{tpu_custom_call.1} parent=47 // pred_check
          %p488 = pneg %p198
        $region74: #{tpu_custom_call.1} parent=47 // pred_check_branch
          %490 = sbr.rel (%p488) target = $region76
        $region75: #{tpu_custom_call.1} parent=47 // pred_region
          %s492 = ssub.s32 128, 128
          %493 = vsyncadd %s484, %s492
          %s494 = smul.addr %s28, 128
          %s495 = scalar_lea.hbm %s7, %s494
          %s497 = sshll.u32 %s487, 4
          %s498 = int_to_ptr.vmem [resolvable:$true] %s497
          %500 = dma.vmem_to_hbm [thread:$0]  %s498, 128, %s495, %s484
        $region76: #{tpu_custom_call.1} parent=47 // pred_fallthru
          _
      $region48: #{tpu_custom_call.1} parent=5 // pred_fallthru
        _
      %p501 = scmp.le.s32.totalorder 2, %s23
      // Predicated region
      $region77: #{tpu_custom_call.1} parent=5 // pred_check
        %p502 = pneg %p501
      $region78: #{tpu_custom_call.1} parent=5 // pred_check_branch
        %504 = sbr.rel (%p502) target = $region80
      $region79: #{tpu_custom_call.1} parent=5 // pred_region
        %s505 = ssub.s32 %s23, 2
        // Predicated region
        $region81: #{tpu_custom_call.1} parent=79 // pred_check
          %p506 = pneg %p204
        $region82: #{tpu_custom_call.1} parent=79 // pred_check_branch
          %508 = sbr.rel (%p506) target = $region84
        $region83: #{tpu_custom_call.1} parent=79 // pred_region
          %s509 = sand.u32 %s189, 1
          %s510 = scalar_lea.sflag [#allocation5], %s509
          %s511 = sand.u32 %s189, 1
          %s512 = smul.addr %s511, 8
          %s513 = scalar_lea.vmem [#allocation14], %s512
          %514 = dma.done %s510, 128
        $region84: #{tpu_custom_call.1} parent=79 // pred_fallthru
          _
      $region80: #{tpu_custom_call.1} parent=5 // pred_fallthru
        _
    $region6: #{tpu_custom_call.1} parent=1 // loop_footer
      %s27 = sadd.s32 1, %s23
    $region7: #{tpu_custom_call.1} parent=1 // loop_footer_branch
      %22 = sbr.rel target = $region3
    $region8: #{tpu_custom_call.1} parent=1 // loop_exit
      _
    %515 = vsyncpa [#allocation4], 1
    %s516 = scalar_lea.sflag [#allocation4], 1
    %517 = vsyncpa %s516, 1
    %518 = vsyncpa [#allocation5], 1
    %s519 = scalar_lea.sflag [#allocation5], 1
    %520 = vsyncpa %s519, 1
    %521 = vsyncpa [#allocation6], 1
    %s522 = scalar_lea.sflag [#allocation6], 1
    %523 = vsyncpa %s522, 1
    %524 = vsyncpa [#allocation9], 1
    %525 = vsyncpa [#allocation12], 1

</llo_original>
